<compile_context>
chip_gen: v5e
topology: v5e:2x2
jax: 0.10.0
libtpu: 0.0.40
codegen_flags: <defaults>
</compile_context>

<pallas_src>
import math
import jax
import jax.numpy as jnp
from jax import lax
from jax.experimental import pallas as pl
from jax.experimental.pallas import tpu as pltpu


def _round_up(n, m):
    return ((n + m - 1) // m) * m


# ----------------------------- Pallas kernel ------------------------------ #
def ddqn_kernel(x_ref, w1_ref, b1_ref, w2_ref, b2_ref, w3_ref, b3_ref, o_ref):
    # fc: obs_dim -> 128, ReLU   (f32 MXU accumulation regardless of dtype)
    h1 = jnp.dot(x_ref[...], w1_ref[...],
                 preferred_element_type=jnp.float32) + b1_ref[...]
    h1 = jnp.maximum(h1, 0.0)

    # noisy1 (plain nn.Linear in the reference module): 128 -> 128, ReLU
    h2 = jnp.dot(h1.astype(w2_ref.dtype), w2_ref[...],
                 preferred_element_type=jnp.float32) + b2_ref[...]
    h2 = jnp.maximum(h2, 0.0)

    # noisy2 (NoisyLinear, effective weight = mu + sigma * epsilon): 128 -> A.
    # Computed transposed:  (A_pad, H) . (tb, H)^T -> (A_pad, tb)
    # so the output block is (A_pad, tb): 8 sublanes of real data, lanes =
    # batch (multiple of 128) -> lane-dense, unmasked stores, no 128-padding
    # of the action dim.
    out_t = lax.dot_general(
        w3_ref[...], h2.astype(w3_ref.dtype),
        dimension_numbers=(((1,), (1,)), ((), ())),
        preferred_element_type=jnp.float32) + b3_ref[...]
    o_ref[...] = out_t.astype(o_ref.dtype)


# ------------------------- forward-pass wrapper ---------------------------- #
def ddqn_forward(x, params, *, block_b=1024):
    """x: (B, obs_dim). params: output of prepare_params. Returns (B, action_dim) f32."""
    w1, b1, w2, b2, w3, b3 = (params["w1"], params["b1"], params["w2"],
                              params["b2"], params["w3"], params["b3"])
    action_dim = params["action_dim"]
    B, obs_dim = x.shape
    H = w1.shape[1]
    a_pad = w3.shape[0]          # action_dim rounded up to a multiple of 8

    # Batch tile: batch is the lane axis of the output -> tb multiple of 128.
    # For B > 128, cap tb at ceil(B/2) (rounded to 128) so the grid has >= 2
    # steps: lets "parallel" shard the batch across v7x's 2 TensorCores and
    # enables pipeline overlap; harmless on v5e/v6e.
    tb = min(block_b, _round_up(B, 128))
    if B > 128:
        tb = min(tb, _round_up(-(-B // 2), 128))
    tb = max(tb, 128)
    b_pad = _round_up(B, tb)

    x = x.astype(w1.dtype)
    if b_pad != B:
        x = jnp.pad(x, ((0, b_pad - B), (0, 0)))

    # Constant index_map -> fetched into VMEM once, resident across the grid.
    pinned = lambda shape: pl.BlockSpec(shape, lambda i: (0, 0))

    out_t = pl.pallas_call(
        ddqn_kernel,
        out_shape=jax.ShapeDtypeStruct((a_pad, b_pad), jnp.float32),
        grid=(b_pad // tb,),
        in_specs=[
            pl.BlockSpec((tb, obs_dim), lambda i: (i, 0)),   # x tile (pipelined)
            pinned((obs_dim, H)),                            # w1 (resident)
            pinned((1, H)),                                  # b1
            pinned((H, H)),                                  # w2
            pinned((1, H)),                                  # b2
            pinned((a_pad, H)),                              # w3 (out, in)
            pinned((a_pad, 1)),                              # b3 (lane-broadcast)
        ],
        out_specs=pl.BlockSpec((a_pad, tb), lambda i: (0, i)),
        compiler_params=pltpu.CompilerParams(
            dimension_semantics=("parallel",),               # megacore on v7x
        ),
    )(x, w1, b1, w2, b2, w3, b3)

    # Tiny (a_pad, B) result -> back to the module's (B, action_dim) layout.
    return out_t[:action_dim, :B].T


# -------------------- one-time parameter preparation ----------------------- #
def prepare_params(raw_params, compute_dtype=jnp.bfloat16):
    """Hoisted (one-time) layout/pad/cast of the weights for the kernel.

    raw_params are in PyTorch layout: w (out, in), b (out,).
    Weights are cast to compute_dtype (bf16 default: halves DMA, 2x MXU on
    v6e/v7x); biases stay f32 (added to the f32 MXU accumulator).
    """
    w1, b1, w2, b2, w3, b3 = raw_params
    a = w3.shape[0]
    a_pad = _round_up(a, 8)
    if a_pad != a:
        w3 = jnp.pad(w3, ((0, a_pad - a), (0, 0)))
        b3 = jnp.pad(b3, ((0, a_pad - a),))
    return {
        "w1": jnp.asarray(w1.T, dtype=compute_dtype),        # (obs, H)
        "b1": jnp.asarray(b1[None, :], dtype=jnp.float32),   # (1, H)
        "w2": jnp.asarray(w2.T, dtype=compute_dtype),        # (H, H)
        "b2": jnp.asarray(b2[None, :], dtype=jnp.float32),   # (1, H)
        "w3": jnp.asarray(w3, dtype=compute_dtype),          # (A_pad, H)  NOT transposed
        "b3": jnp.asarray(b3[:, None], dtype=jnp.float32),   # (A_pad, 1)
        "action_dim": a,
    }


# -------------------------- parameter construction ------------------------- #
def _scale_noise(key, size):
    # f(x) = sign(x) * sqrt(|x|)   (NoisyLinear factorized-noise transform)
    n = jax.random.normal(key, (size,), dtype=jnp.float32)
    return jnp.sign(n) * jnp.sqrt(jnp.abs(n))


def make_params(key, observation_dim, action_dim, std_init=0.5):
    """Parameters in PyTorch layout (w: (out, in), b: (out,))."""
    k = jax.random.split(key, 9)
    H = 128

    # fc: nn.Linear(observation_dim, 128)  -- default PyTorch uniform init
    r1 = 1.0 / math.sqrt(observation_dim)
    w1 = jax.random.uniform(k[0], (H, observation_dim), jnp.float32, -r1, r1)
    b1 = jax.random.uniform(k[1], (H,), jnp.float32, -r1, r1)

    # noisy1: nn.Linear(128, 128)
    r2 = 1.0 / math.sqrt(H)
    w2 = jax.random.uniform(k[2], (H, H), jnp.float32, -r2, r2)
    b2 = jax.random.uniform(k[3], (H,), jnp.float32, -r2, r2)

    # noisy2: NoisyLinear(128, action_dim) in training mode
    mu_range = 1.0 / math.sqrt(H)
    w_mu = jax.random.uniform(k[4], (action_dim, H), jnp.float32, -mu_range, mu_range)
    b_mu = jax.random.uniform(k[5], (action_dim,), jnp.float32, -mu_range, mu_range)
    w_sigma = jnp.full((action_dim, H), std_init / math.sqrt(H), jnp.float32)
    b_sigma = jnp.full((action_dim,), std_init / math.sqrt(action_dim), jnp.float32)
    eps_in = _scale_noise(k[6], H)
    eps_out = _scale_noise(k[7], action_dim)
    w3 = w_mu + w_sigma * jnp.outer(eps_out, eps_in)   # epsilon_out.ger(epsilon_in)
    b3 = b_mu + b_sigma * _scale_noise(k[8], action_dim)

    return (w1, b1, w2, b2, w3, b3)


# ----------------------------- pure-JAX reference -------------------------- #
def ddqn_ref(x, raw_params):
    w1, b1, w2, b2, w3, b3 = raw_params
    h1 = jnp.maximum(x @ w1.T + b1, 0.0)
    h2 = jnp.maximum(h1 @ w2.T + b2, 0.0)
    return h2 @ w3.T + b3


if __name__ == "__main__":
    observation_dim = 16
    action_dim = 8

    key = jax.random.PRNGKey(0)
    kx, kp, kb = jax.random.split(key, 3)
    raw = make_params(kp, observation_dim, action_dim)

    # f32 path -- strict correctness check against the pure-JAX reference.
    p_f32 = prepare_params(raw, compute_dtype=jnp.float32)
    x_small = jax.random.normal(kx, (2, observation_dim), dtype=jnp.float32)
    out = jax.block_until_ready(ddqn_forward(x_small, p_f32))
    ref = ddqn_ref(x_small, raw)
    assert out.shape == (2, action_dim)
    assert jnp.allclose(out, ref, atol=1e-5, rtol=1e-5), "f32 small-batch mismatch"

    # Replay-buffer-sized batch exercising the multi-step (>=2) batch grid.
    x_big = jax.random.normal(kb, (512, observation_dim), dtype=jnp.float32)
    out_big = jax.block_until_ready(ddqn_forward(x_big, p_f32))
    ref_big = ddqn_ref(x_big, raw)
    assert out_big.shape == (512, action_dim)
    assert jnp.allclose(out_big, ref_big, atol=1e-4, rtol=1e-4), "f32 big-batch mismatch"

    # Default bf16 weights/x with f32 accumulation (halved DMA, 2x MXU on v6e/v7x).
    p_bf16 = prepare_params(raw)   # compute_dtype defaults to bf16
    out_bf16 = jax.block_until_ready(ddqn_forward(x_big, p_bf16))
    assert out_bf16.shape == (512, action_dim)
    assert jnp.allclose(out_bf16, ref_big, atol=1e-1, rtol=1e-1), "bf16 mismatch"

    print("KERNEL_OK")
</pallas_src>

<mosaic_0001>
module attributes {stable_mosaic.version = 11 : i64} {
  func.func @ddqn_kernel(%arg0: i32, %arg1: memref<128x16xf32, #tpu.memory_space<vmem>>, %arg2: memref<16x128xf32, #tpu.memory_space<vmem>>, %arg3: memref<1x128xf32, #tpu.memory_space<vmem>>, %arg4: memref<128x128xf32, #tpu.memory_space<vmem>>, %arg5: memref<1x128xf32, #tpu.memory_space<vmem>>, %arg6: memref<8x128xf32, #tpu.memory_space<vmem>>, %arg7: memref<8x1xf32, #tpu.memory_space<vmem>>, %arg8: memref<8x128xf32, #tpu.memory_space<vmem>>) attributes {dimension_semantics = [#tpu.dimension_semantics<parallel>], iteration_bounds = array<i64: 1>, scalar_prefetch = 0 : i64, scratch_operands = 0 : i64, tpu.core_type = #tpu.core_type<tc>, window_params = [{transform_indices = @transform_0, window_bounds = array<i64: 128, 16>}, {pipeline_mode = #tpu.pipeline_mode<synchronous>, transform_indices = @transform_1, window_bounds = array<i64: 16, 128>}, {pipeline_mode = #tpu.pipeline_mode<synchronous>, transform_indices = @transform_2, window_bounds = array<i64: 1, 128>}, {pipeline_mode = #tpu.pipeline_mode<synchronous>, transform_indices = @transform_3, window_bounds = array<i64: 128, 128>}, {pipeline_mode = #tpu.pipeline_mode<synchronous>, transform_indices = @transform_4, window_bounds = array<i64: 1, 128>}, {pipeline_mode = #tpu.pipeline_mode<synchronous>, transform_indices = @transform_5, window_bounds = array<i64: 8, 128>}, {pipeline_mode = #tpu.pipeline_mode<synchronous>, transform_indices = @transform_6, window_bounds = array<i64: 8, 1>}, {transform_indices = @transform_7, window_bounds = array<i64: 8, 128>}]} {
    %c0 = arith.constant 0 : index
    %c0_0 = arith.constant 0 : index
    %0 = vector.load %arg1[%c0, %c0_0] : memref<128x16xf32, #tpu.memory_space<vmem>>, vector<128x16xf32>
    %c0_1 = arith.constant 0 : index
    %c0_2 = arith.constant 0 : index
    %1 = vector.load %arg2[%c0_1, %c0_2] : memref<16x128xf32, #tpu.memory_space<vmem>>, vector<16x128xf32>
    %cst = arith.constant dense<0.000000e+00> : vector<128x128xf32>
    %2 = tpu.matmul %0, %1, %cst {dimension_numbers = #tpu.dot_dimension_numbers<[1], [0], [0], [1], [0, 0, 1, 1], [], []>} : vector<128x16xf32>, vector<16x128xf32>, vector<128x128xf32> -> vector<128x128xf32>
    %c0_3 = arith.constant 0 : index
    %c0_4 = arith.constant 0 : index
    %3 = vector.load %arg3[%c0_3, %c0_4] : memref<1x128xf32, #tpu.memory_space<vmem>>, vector<1x128xf32>
    %4 = vector.broadcast %3 : vector<1x128xf32> to vector<128x128xf32>
    %5 = arith.addf %2, %4 : vector<128x128xf32>
    %cst_5 = arith.constant 0.000000e+00 : f32
    %6 = vector.broadcast %cst_5 : f32 to vector<128x128xf32>
    %7 = arith.maximumf %5, %6 : vector<128x128xf32>
    %c0_6 = arith.constant 0 : index
    %c0_7 = arith.constant 0 : index
    %8 = vector.load %arg4[%c0_6, %c0_7] : memref<128x128xf32, #tpu.memory_space<vmem>>, vector<128x128xf32>
    %cst_8 = arith.constant dense<0.000000e+00> : vector<128x128xf32>
    %9 = tpu.matmul %7, %8, %cst_8 {dimension_numbers = #tpu.dot_dimension_numbers<[1], [0], [0], [1], [0, 0, 1, 1], [], []>} : vector<128x128xf32>, vector<128x128xf32>, vector<128x128xf32> -> vector<128x128xf32>
    %c0_9 = arith.constant 0 : index
    %c0_10 = arith.constant 0 : index
    %10 = vector.load %arg5[%c0_9, %c0_10] : memref<1x128xf32, #tpu.memory_space<vmem>>, vector<1x128xf32>
    %11 = vector.broadcast %10 : vector<1x128xf32> to vector<128x128xf32>
    %12 = arith.addf %9, %11 : vector<128x128xf32>
    %cst_11 = arith.constant 0.000000e+00 : f32
    %13 = vector.broadcast %cst_11 : f32 to vector<128x128xf32>
    %14 = arith.maximumf %12, %13 : vector<128x128xf32>
    %c0_12 = arith.constant 0 : index
    %c0_13 = arith.constant 0 : index
    %15 = vector.load %arg6[%c0_12, %c0_13] : memref<8x128xf32, #tpu.memory_space<vmem>>, vector<8x128xf32>
    %cst_14 = arith.constant dense<0.000000e+00> : vector<8x128xf32>
    %16 = tpu.matmul %15, %14, %cst_14 {dimension_numbers = #tpu.dot_dimension_numbers<[1], [1], [0], [0], [0, 0, 1, 0], [], []>} : vector<8x128xf32>, vector<128x128xf32>, vector<8x128xf32> -> vector<8x128xf32>
    %c0_15 = arith.constant 0 : index
    %c0_16 = arith.constant 0 : index
    %17 = vector.load %arg7[%c0_15, %c0_16] : memref<8x1xf32, #tpu.memory_space<vmem>>, vector<8x1xf32>
    %18 = vector.broadcast %17 : vector<8x1xf32> to vector<8x128xf32>
    %19 = arith.addf %16, %18 : vector<8x128xf32>
    %c0_17 = arith.constant 0 : index
    %c0_18 = arith.constant 0 : index
    %20 = vector.load %arg8[%c0_17, %c0_18] : memref<8x128xf32, #tpu.memory_space<vmem>>, vector<8x128xf32>
    tpu.vector_store %arg8[%c0_17, %c0_18], %19 {strides = array<i32>} : memref<8x128xf32, #tpu.memory_space<vmem>>, vector<8x128xf32>,
    return
  }
  func.func @transform_0(%arg0: i32) -> (i32, i32) {
    %c0_i32 = arith.constant 0 : i32
    %c0_i32_0 = arith.constant 0 : i32
    return %arg0, %c0_i32 : i32, i32
  }
  func.func @transform_1(%arg0: i32) -> (i32, i32) {
    %c0_i32 = arith.constant 0 : i32
    %c0_i32_0 = arith.constant 0 : i32
    %c0_i32_1 = arith.constant 0 : i32
    return %c0_i32, %c0_i32_0 : i32, i32
  }
  func.func @transform_2(%arg0: i32) -> (i32, i32) {
    %c0_i32 = arith.constant 0 : i32
    %c0_i32_0 = arith.constant 0 : i32
    %c0_i32_1 = arith.constant 0 : i32
    return %c0_i32, %c0_i32_0 : i32, i32
  }
  func.func @transform_3(%arg0: i32) -> (i32, i32) {
    %c0_i32 = arith.constant 0 : i32
    %c0_i32_0 = arith.constant 0 : i32
    %c0_i32_1 = arith.constant 0 : i32
    return %c0_i32, %c0_i32_0 : i32, i32
  }
  func.func @transform_4(%arg0: i32) -> (i32, i32) {
    %c0_i32 = arith.constant 0 : i32
    %c0_i32_0 = arith.constant 0 : i32
    %c0_i32_1 = arith.constant 0 : i32
    return %c0_i32, %c0_i32_0 : i32, i32
  }
  func.func @transform_5(%arg0: i32) -> (i32, i32) {
    %c0_i32 = arith.constant 0 : i32
    %c0_i32_0 = arith.constant 0 : i32
    %c0_i32_1 = arith.constant 0 : i32
    return %c0_i32, %c0_i32_0 : i32, i32
  }
  func.func @transform_6(%arg0: i32) -> (i32, i32) {
    %c0_i32 = arith.constant 0 : i32
    %c0_i32_0 = arith.constant 0 : i32
    %c0_i32_1 = arith.constant 0 : i32
    return %c0_i32, %c0_i32_0 : i32, i32
  }
  func.func @transform_7(%arg0: i32) -> (i32, i32) {
    %c0_i32 = arith.constant 0 : i32
    %c0_i32_0 = arith.constant 0 : i32
    return %c0_i32, %arg0 : i32, i32
  }
}

</mosaic_0001>

<llo_original>
// kernel: tpu_custom_call.1
$region0: #{tpu_custom_call.1}
  #allocation0 [shape = 'u32[]', space=smem, size = 0x4, offset = 0x4, fixed_abs, tag = 'smem constant byte address 0x4 - core index']
  #allocation1 [shape = 'u32[72,128]{1,0:T(1,128)}', space=vmem, size = 0x9000, scoped, tag = 'internal scratch']
  %s0 = inlined_call_operand.vmem [shape: f32[128,16], index: 0, kind: input, shape index: {}]
  %s1 = inlined_call_operand.vmem [shape: f32[16,128], index: 1, kind: input, shape index: {}]
  %s2 = inlined_call_operand.vmem [shape: f32[1,128], index: 2, kind: input, shape index: {}]
  %s3 = inlined_call_operand.vmem [shape: f32[128,128], index: 3, kind: input, shape index: {}]
  %s4 = inlined_call_operand.vmem [shape: f32[1,128], index: 4, kind: input, shape index: {}]
  %s5 = inlined_call_operand.vmem [shape: f32[8,128], index: 5, kind: input, shape index: {}]
  %s6 = inlined_call_operand.vmem [shape: f32[8,1], index: 6, kind: input, shape index: {}]
  %s7 = inlined_call_operand.hbm [shape: f32[8,128], index: 7, kind: output, shape index: {}]
  %s8 = sld [smem:[#allocation0]]
  $region38: #{tpu_custom_call.1} parent=0
    _
  %s10 = ssub.s32 1, %s8
  %s11 = scalar_select 0, %s10, %s8
  $region1: #{tpu_custom_call.1} parent=0
    #allocation2 [shape = 'u8[4096]{0}', space=vmem, size = 0x1000, scoped, tag = 'output window, operand 0, single buffered']
    #allocation3 [shape = 's32[1]{0}', space=sflag, size = 0x4, scoped, tag = 'scoped memory for tpu_custom_call.1']
    %12 = vsyncpa [#allocation3], 0
    // Predicated region
    $region2: #{tpu_custom_call.1} parent=1 // pred_check
      _
    $region3: #{tpu_custom_call.1} parent=1 // pred_check_branch
      %14 = sbr.rel (0) target = $region5
    $region4: #{tpu_custom_call.1} parent=1 // pred_region
      _
    $region5: #{tpu_custom_call.1} parent=1 // pred_fallthru
      _
    // Predicated region
    $region6: #{tpu_custom_call.1} parent=1 // pred_check
      _
    $region7: #{tpu_custom_call.1} parent=1 // pred_check_branch
      %16 = sbr.rel (0) target = $region9
    $region8: #{tpu_custom_call.1} parent=1 // pred_region
      _
    $region9: #{tpu_custom_call.1} parent=1 // pred_fallthru
      _
    // Predicated region
    $region10: #{tpu_custom_call.1} parent=1 // pred_check
      _
    $region11: #{tpu_custom_call.1} parent=1 // pred_check_branch
      %18 = sbr.rel (0) target = $region13
    $region12: #{tpu_custom_call.1} parent=1 // pred_region
      _
    $region13: #{tpu_custom_call.1} parent=1 // pred_fallthru
      _
    // Predicated region
    $region14: #{tpu_custom_call.1} parent=1 // pred_check
      _
    $region15: #{tpu_custom_call.1} parent=1 // pred_check_branch
      %20 = sbr.rel (0) target = $region17
    $region16: #{tpu_custom_call.1} parent=1 // pred_region
      _
    $region17: #{tpu_custom_call.1} parent=1 // pred_fallthru
      _
    // Predicated region
    $region18: #{tpu_custom_call.1} parent=1 // pred_check
      _
    $region19: #{tpu_custom_call.1} parent=1 // pred_check_branch
      %22 = sbr.rel (0) target = $region21
    $region20: #{tpu_custom_call.1} parent=1 // pred_region
      _
    $region21: #{tpu_custom_call.1} parent=1 // pred_fallthru
      _
    // Predicated region
    $region22: #{tpu_custom_call.1} parent=1 // pred_check
      _
    $region23: #{tpu_custom_call.1} parent=1 // pred_check_branch
      %24 = sbr.rel (0) target = $region25
    $region24: #{tpu_custom_call.1} parent=1 // pred_region
      _
    $region25: #{tpu_custom_call.1} parent=1 // pred_fallthru
      _
    // Predicated region
    $region26: #{tpu_custom_call.1} parent=1 // pred_check
      _
    $region27: #{tpu_custom_call.1} parent=1 // pred_check_branch
      %26 = sbr.rel (0) target = $region29
    $region28: #{tpu_custom_call.1} parent=1 // pred_region
      _
    $region29: #{tpu_custom_call.1} parent=1 // pred_fallthru
      _
    %v27 = vld [vmem:[%s0] sm:$0xff]
    %v28 = vld [vmem:[%s0 + $0x8] sm:$0xff]
    %v29 = vld [vmem:[%s0 + $0x10] sm:$0xff]
    %v30 = vld [vmem:[%s0 + $0x18] sm:$0xff]
    %v31 = vld [vmem:[%s0 + $0x20] sm:$0xff]
    %v32 = vld [vmem:[%s0 + $0x28] sm:$0xff]
    %v33 = vld [vmem:[%s0 + $0x30] sm:$0xff]
    %v34 = vld [vmem:[%s0 + $0x38] sm:$0xff]
    %v35 = vld [vmem:[%s0 + $0x40] sm:$0xff]
    %v36 = vld [vmem:[%s0 + $0x48] sm:$0xff]
    %v37 = vld [vmem:[%s0 + $0x50] sm:$0xff]
    %v38 = vld [vmem:[%s0 + $0x58] sm:$0xff]
    %v39 = vld [vmem:[%s0 + $0x60] sm:$0xff]
    %v40 = vld [vmem:[%s0 + $0x68] sm:$0xff]
    %v41 = vld [vmem:[%s0 + $0x70] sm:$0xff]
    %v42 = vld [vmem:[%s0 + $0x78] sm:$0xff]
    %v43 = vld [vmem:[%s1] sm:$0xff]
    %v44 = vld [vmem:[%s1 + $0x8] sm:$0xff]
    %v45 = vld [vmem:[%s2] sm:$0x1]
    %v47 = vperm.slane %v45, 0
    %vm49 = vcmask 130048
    %v51 = vsel %vm49, %v27, 0
    %v54 = vsel %vm49, %v28, 0
    %v57 = vsel %vm49, %v29, 0
    %v60 = vsel %vm49, %v30, 0
    %v63 = vsel %vm49, %v31, 0
    %v66 = vsel %vm49, %v32, 0
    %v69 = vsel %vm49, %v33, 0
    %v72 = vsel %vm49, %v34, 0
    %v75 = vsel %vm49, %v35, 0
    %v78 = vsel %vm49, %v36, 0
    %v81 = vsel %vm49, %v37, 0
    %v84 = vsel %vm49, %v38, 0
    %v87 = vsel %vm49, %v39, 0
    %v90 = vsel %vm49, %v40, 0
    %v93 = vsel %vm49, %v41, 0
    %v96 = vsel %vm49, %v42, 0
    %98 = vmatpush.msra.mxu0 0.0
    %99 = vmatpush.msra.mxu0 0.0
    %100 = vmatpush.msra.mxu0 0.0
    %101 = vmatpush.msra.mxu0 0.0
    %102 = vmatpush.msra.mxu0 0.0
    %103 = vmatpush.msra.mxu0 0.0
    %104 = vmatpush.msra.mxu0 0.0
    %105 = vmatpush.msra.mxu0 0.0
    %106 = vmatpush.msra.mxu0 0.0
    %107 = vmatpush.msra.mxu0 0.0
    %108 = vmatpush.msra.mxu0 0.0
    %109 = vmatpush.msra.mxu0 0.0
    %110 = vmatpush.msra.mxu0 0.0
    %111 = vmatpush.msra.mxu0 0.0
    %112 = vmatpush.msra.mxu0 %v44
    %113 = vmatpush.msra.mxu0 %v43
    %114 = vmatmul.f32.gmra.mxu0 %v51
    %v115 = vpop.f32.mrf.mxu0
    %v116 = vadd.f32 %v47, %v115
    %117 = vmatmul.f32.gmra.mxu0 %v54
    %v118 = vpop.f32.mrf.mxu0
    %v119 = vadd.f32 %v47, %v118
    %120 = vmatmul.f32.gmra.mxu0 %v57
    %v121 = vpop.f32.mrf.mxu0
    %v122 = vadd.f32 %v47, %v121
    %123 = vmatmul.f32.gmra.mxu0 %v60
    %v124 = vpop.f32.mrf.mxu0
    %v125 = vadd.f32 %v47, %v124
    %126 = vmatmul.f32.gmra.mxu0 %v63
    %v127 = vpop.f32.mrf.mxu0
    %v128 = vadd.f32 %v47, %v127
    %129 = vmatmul.f32.gmra.mxu0 %v66
    %v130 = vpop.f32.mrf.mxu0
    %v131 = vadd.f32 %v47, %v130
    %132 = vmatmul.f32.gmra.mxu0 %v69
    %v133 = vpop.f32.mrf.mxu0
    %v134 = vadd.f32 %v47, %v133
    %135 = vmatmul.f32.gmra.mxu0 %v72
    %v136 = vpop.f32.mrf.mxu0
    %v137 = vadd.f32 %v47, %v136
    %138 = vmatmul.f32.gmra.mxu0 %v75
    %v139 = vpop.f32.mrf.mxu0
    %v140 = vadd.f32 %v47, %v139
    %141 = vmatmul.f32.gmra.mxu0 %v78
    %v142 = vpop.f32.mrf.mxu0
    %v143 = vadd.f32 %v47, %v142
    %144 = vmatmul.f32.gmra.mxu0 %v81
    %v145 = vpop.f32.mrf.mxu0
    %v146 = vadd.f32 %v47, %v145
    %147 = vmatmul.f32.gmra.mxu0 %v84
    %v148 = vpop.f32.mrf.mxu0
    %v149 = vadd.f32 %v47, %v148
    %150 = vmatmul.f32.gmra.mxu0 %v87
    %v151 = vpop.f32.mrf.mxu0
    %v152 = vadd.f32 %v47, %v151
    %153 = vmatmul.f32.gmra.mxu0 %v90
    %v154 = vpop.f32.mrf.mxu0
    %v155 = vadd.f32 %v47, %v154
    %156 = vmatmul.f32.gmra.mxu0 %v93
    %v157 = vpop.f32.mrf.mxu0
    %v158 = vadd.f32 %v47, %v157
    %159 = vmatmul.f32.gmra.mxu0 %v96
    %v160 = vpop.f32.mrf.mxu0
    %v161 = vadd.f32 %v47, %v160
    %162 = vdwg.mxu0
    %v163 = vmax.f32 %v116, 0.0
    %v164 = vmax.f32 %v119, 0.0
    %v165 = vmax.f32 %v122, 0.0
    %v166 = vmax.f32 %v125, 0.0
    %v167 = vmax.f32 %v128, 0.0
    %v168 = vmax.f32 %v131, 0.0
    %v169 = vmax.f32 %v134, 0.0
    %v170 = vmax.f32 %v137, 0.0
    %v171 = vmax.f32 %v140, 0.0
    %v172 = vmax.f32 %v143, 0.0
    %v173 = vmax.f32 %v146, 0.0
    %v174 = vmax.f32 %v149, 0.0
    %v175 = vmax.f32 %v152, 0.0
    %v176 = vmax.f32 %v155, 0.0
    %v177 = vmax.f32 %v158, 0.0
    %v178 = vmax.f32 %v161, 0.0
    %v179 = vld [vmem:[%s3] sm:$0xff]
    %v180 = vld [vmem:[%s3 + $0x8] sm:$0xff]
    %v181 = vld [vmem:[%s3 + $0x10] sm:$0xff]
    %v182 = vld [vmem:[%s3 + $0x18] sm:$0xff]
    %v183 = vld [vmem:[%s3 + $0x20] sm:$0xff]
    %v184 = vld [vmem:[%s3 + $0x28] sm:$0xff]
    %v185 = vld [vmem:[%s3 + $0x30] sm:$0xff]
    %v186 = vld [vmem:[%s3 + $0x38] sm:$0xff]
    %v187 = vld [vmem:[%s3 + $0x40] sm:$0xff]
    %v188 = vld [vmem:[%s3 + $0x48] sm:$0xff]
    %v189 = vld [vmem:[%s3 + $0x50] sm:$0xff]
    %v190 = vld [vmem:[%s3 + $0x58] sm:$0xff]
    %v191 = vld [vmem:[%s3 + $0x60] sm:$0xff]
    %v192 = vld [vmem:[%s3 + $0x68] sm:$0xff]
    %v193 = vld [vmem:[%s3 + $0x70] sm:$0xff]
    %v194 = vld [vmem:[%s3 + $0x78] sm:$0xff]
    %v195 = vld [vmem:[%s4] sm:$0x1]
    %v197 = vperm.slane %v195, 0
    %199 = vmatpush.msra.mxu0 %v194
    %200 = vmatpush.msra.mxu0 %v193
    %201 = vmatpush.msra.mxu0 %v192
    %202 = vmatpush.msra.mxu0 %v191
    %203 = vmatpush.msra.mxu0 %v190
    %204 = vmatpush.msra.mxu0 %v189
    %205 = vmatpush.msra.mxu0 %v188
    %206 = vmatpush.msra.mxu0 %v187
    %207 = vmatpush.msra.mxu0 %v186
    %208 = vmatpush.msra.mxu0 %v185
    %209 = vmatpush.msra.mxu0 %v184
    %210 = vmatpush.msra.mxu0 %v183
    %211 = vmatpush.msra.mxu0 %v182
    %212 = vmatpush.msra.mxu0 %v181
    %213 = vmatpush.msra.mxu0 %v180
    %214 = vmatpush.msra.mxu0 %v179
    %215 = vmatmul.f32.gmra.mxu0 %v163
    %v216 = vpop.f32.mrf.mxu0
    %v217 = vadd.f32 %v197, %v216
    %218 = vmatmul.f32.gmra.mxu0 %v164
    %v219 = vpop.f32.mrf.mxu0
    %v220 = vadd.f32 %v197, %v219
    %221 = vmatmul.f32.gmra.mxu0 %v165
    %v222 = vpop.f32.mrf.mxu0
    %v223 = vadd.f32 %v197, %v222
    %224 = vmatmul.f32.gmra.mxu0 %v166
    %v225 = vpop.f32.mrf.mxu0
    %v226 = vadd.f32 %v197, %v225
    %227 = vmatmul.f32.gmra.mxu0 %v167
    %v228 = vpop.f32.mrf.mxu0
    %v229 = vadd.f32 %v197, %v228
    %230 = vmatmul.f32.gmra.mxu0 %v168
    %v231 = vpop.f32.mrf.mxu0
    %v232 = vadd.f32 %v197, %v231
    %233 = vmatmul.f32.gmra.mxu0 %v169
    %v234 = vpop.f32.mrf.mxu0
    %v235 = vadd.f32 %v197, %v234
    %236 = vmatmul.f32.gmra.mxu0 %v170
    %v237 = vpop.f32.mrf.mxu0
    %v238 = vadd.f32 %v197, %v237
    %239 = vmatmul.f32.gmra.mxu0 %v171
    %v240 = vpop.f32.mrf.mxu0
    %v241 = vadd.f32 %v197, %v240
    %242 = vmatmul.f32.gmra.mxu0 %v172
    %v243 = vpop.f32.mrf.mxu0
    %v244 = vadd.f32 %v197, %v243
    %245 = vmatmul.f32.gmra.mxu0 %v173
    %v246 = vpop.f32.mrf.mxu0
    %v247 = vadd.f32 %v197, %v246
    %248 = vmatmul.f32.gmra.mxu0 %v174
    %v249 = vpop.f32.mrf.mxu0
    %v250 = vadd.f32 %v197, %v249
    %251 = vmatmul.f32.gmra.mxu0 %v175
    %v252 = vpop.f32.mrf.mxu0
    %v253 = vadd.f32 %v197, %v252
    %254 = vmatmul.f32.gmra.mxu0 %v176
    %v255 = vpop.f32.mrf.mxu0
    %v256 = vadd.f32 %v197, %v255
    %257 = vmatmul.f32.gmra.mxu0 %v177
    %v258 = vpop.f32.mrf.mxu0
    %v259 = vadd.f32 %v197, %v258
    %260 = vmatmul.f32.gmra.mxu0 %v178
    %v261 = vpop.f32.mrf.mxu0
    %v262 = vadd.f32 %v197, %v261
    %263 = vdwg.mxu0
    %v264 = vmax.f32 %v217, 0.0
    %v265 = vmax.f32 %v220, 0.0
    %v266 = vmax.f32 %v223, 0.0
    %v267 = vmax.f32 %v226, 0.0
    %v268 = vmax.f32 %v229, 0.0
    %v269 = vmax.f32 %v232, 0.0
    %v270 = vmax.f32 %v235, 0.0
    %v271 = vmax.f32 %v238, 0.0
    %v272 = vmax.f32 %v241, 0.0
    %v273 = vmax.f32 %v244, 0.0
    %v274 = vmax.f32 %v247, 0.0
    %v275 = vmax.f32 %v250, 0.0
    %v276 = vmax.f32 %v253, 0.0
    %v277 = vmax.f32 %v256, 0.0
    %v278 = vmax.f32 %v259, 0.0
    %v279 = vmax.f32 %v262, 0.0
    %v280 = vld [vmem:[%s5] sm:$0xff]
    %v281 = vld [vmem:[%s6] sm:$0xff]
    %283 = vset.pattern.permute.xlu0 0
    %284 = vperm.xlu0 %283, %v281
    %v285 = vpop.permute.xlu0 %284
    %287 = vmatpush.xpose.msra.mxu0 %v279
    %288 = vmatpush.xpose.msra.mxu0 %v278
    %289 = vmatpush.xpose.msra.mxu0 %v277
    %290 = vmatpush.xpose.msra.mxu0 %v276
    %291 = vmatpush.xpose.msra.mxu0 %v275
    %292 = vmatpush.xpose.msra.mxu0 %v274
    %293 = vmatpush.xpose.msra.mxu0 %v273
    %294 = vmatpush.xpose.msra.mxu0 %v272
    %295 = vmatpush.xpose.msra.mxu0 %v271
    %296 = vmatpush.xpose.msra.mxu0 %v270
    %297 = vmatpush.xpose.msra.mxu0 %v269
    %298 = vmatpush.xpose.msra.mxu0 %v268
    %299 = vmatpush.xpose.msra.mxu0 %v267
    %300 = vmatpush.xpose.msra.mxu0 %v266
    %301 = vmatpush.xpose.msra.mxu0 %v265
    %302 = vmatpush.xpose.msra.mxu0 %v264
    %303 = vmatmul.f32.gmra.mxu0 %v280
    %v304 = vpop.f32.mrf.mxu0
    %v305 = vadd.f32 %v285, %v304
    %306 = vdwg.mxu0
    %307 = vst [vmem:[#allocation2] sm:$0xff] %v305
    // Predicated region
    $region30: #{tpu_custom_call.1} parent=1 // pred_check
      _
    $region31: #{tpu_custom_call.1} parent=1 // pred_check_branch
      %309 = sbr.rel (0) target = $region33
    $region32: #{tpu_custom_call.1} parent=1 // pred_region
      %311 = vsyncadd [#allocation3], 0
      %s313 = sshll.u32 [#allocation2], 4
      %s314 = int_to_ptr.vmem [resolvable:$true] %s313
      %s315 = sshll.u32 %s7, 4
      %s316 = int_to_ptr.hbm [resolvable:$true] %s315
      %318 = dma.vmem_to_hbm [thread:$0]  %s314, 128, %s316, [#allocation3]
    $region33: #{tpu_custom_call.1} parent=1 // pred_fallthru
      _
    // Predicated region
    $region34: #{tpu_custom_call.1} parent=1 // pred_check
      _
    $region35: #{tpu_custom_call.1} parent=1 // pred_check_branch
      %320 = sbr.rel (0) target = $region37
    $region36: #{tpu_custom_call.1} parent=1 // pred_region
      %322 = dma.done [#allocation3], 128
    $region37: #{tpu_custom_call.1} parent=1 // pred_fallthru
      _
    %323 = vsyncpa [#allocation3], 1

</llo_original>
